<compile_context>
chip_gen: v6e
topology: v6e:2x2x1
jax: 0.10.0
libtpu: 0.0.40
codegen_flags: <defaults>
</compile_context>

<pallas_src>
import functools

import jax
import jax.numpy as jnp
from jax import lax
from jax.experimental import pallas as pl
from jax.experimental.pallas import tpu as pltpu

LANES = 128
MAX_TILE_ROWS = 8192   # 4 MiB f32 per input block; 2 inputs x 2 bufs = 16 MiB
SUBLANE_MULT = 32      # block sublane multiple that tiles cleanly for f32/bf16/int8


def _dice_kernel(x_ref, t_ref, out_ref, acc_ref, *, n, tile_rows, total_tiles):
    i = pl.program_id(0)

    @pl.when(i == 0)
    def _():
        acc_ref[...] = jnp.zeros_like(acc_ref)

    x = x_ref[...].astype(jnp.float32)
    t = t_ref[...].astype(jnp.float32)
    sx = jax.nn.sigmoid(x)

    def accumulate(sxv, tv):
        # row 0: intersection, row 1: fused denominator sum(sigmoid(x)) + sum(t).
        acc_ref[0:1, :] += jnp.sum(sxv * tv, axis=0, keepdims=True)
        acc_ref[1:2, :] += jnp.sum(sxv + tv, axis=0, keepdims=True)

    last = total_tiles - 1
    n_last = n - last * tile_rows * LANES   # static Python int, 1..tile_rows*LANES

    if n_last == tile_rows * LANES:
        # n divides evenly into full tiles: no mask needed anywhere.
        accumulate(sx, t)
    else:
        @pl.when(i != last)
        def _():
            # Fast path: full tile, zero masking overhead.
            accumulate(sx, t)

        @pl.when(i == last)
        def _():
            # Ragged last tile only: tile-local flat index (fits int32 easily).
            local = (lax.broadcasted_iota(jnp.int32, (tile_rows, LANES), 0) * LANES
                     + lax.broadcasted_iota(jnp.int32, (tile_rows, LANES), 1))
            valid = local < n_last
            accumulate(jnp.where(valid, sx, 0.0), jnp.where(valid, t, 0.0))

    @pl.when(i == total_tiles - 1)
    def _():
        out_ref[...] = acc_ref[...]


def dice_loss(inputs, targets, smooth=1e-5):
    """Pallas TPU implementation of DiceLoss.forward (returns a scalar)."""
    x = inputs.reshape(-1)
    t = targets.reshape(-1)
    n = x.shape[0]

    # Pad only the ragged tail to a multiple of 128 lanes (no-op for most
    # shapes); the kernel masks on the true `n`, so pad values are irrelevant.
    n_pad = ((n + LANES - 1) // LANES) * LANES
    if n_pad != n:
        x = jnp.pad(x, (0, n_pad - n))
        t = jnp.pad(t, (0, n_pad - n))
    rows = n_pad // LANES

    tile_rows = min(
        MAX_TILE_ROWS, ((rows + SUBLANE_MULT - 1) // SUBLANE_MULT) * SUBLANE_MULT
    )
    total_tiles = (rows + tile_rows - 1) // tile_rows

    x2 = x.reshape(rows, LANES)   # free reshape, native dtype in HBM
    t2 = t.reshape(rows, LANES)

    kernel = functools.partial(
        _dice_kernel, n=n, tile_rows=tile_rows, total_tiles=total_tiles
    )

    partials = pl.pallas_call(
        kernel,
        out_shape=jax.ShapeDtypeStruct((8, LANES), jnp.float32),
        grid_spec=pltpu.PrefetchScalarGridSpec(
            num_scalar_prefetch=0,
            grid=(total_tiles,),
            in_specs=[
                pl.BlockSpec((tile_rows, LANES), lambda i: (i, 0)),
                pl.BlockSpec((tile_rows, LANES), lambda i: (i, 0)),
            ],
            out_specs=pl.BlockSpec((8, LANES), lambda i: (0, 0)),
            scratch_shapes=[pltpu.VMEM((8, LANES), jnp.float32)],
        ),
        compiler_params=pltpu.CompilerParams(
            dimension_semantics=("arbitrary",),
            vmem_limit_bytes=32 * 1024 * 1024,
        ),
    )(x2, t2)

    # Tiny final combine in XLA: cross-lane reduce + dice formula.
    inter = jnp.sum(partials[0, :])
    denom = jnp.sum(partials[1, :])          # = sum(sigmoid(x)) + sum(t)
    smooth = jnp.float32(smooth)
    dice = (2.0 * inter + smooth) / (denom + smooth)
    return (1.0 - dice).astype(jnp.float32)


def dice_loss_ref(inputs, targets, smooth=1e-5):
    x = jax.nn.sigmoid(inputs.astype(jnp.float32)).reshape(-1)
    t = targets.astype(jnp.float32).reshape(-1)
    inter = jnp.sum(x * t)
    dice = (2.0 * inter + smooth) / (jnp.sum(x) + jnp.sum(t) + smooth)
    return 1.0 - dice


if __name__ == "__main__":
    key = jax.random.PRNGKey(0)
    k1, k2 = jax.random.split(key)
    # NCHW logits and binary targets, small shapes.
    x = jax.random.normal(k1, (2, 4, 16, 16), dtype=jnp.float32)
    t = (jax.random.uniform(k2, (2, 4, 16, 16)) > 0.5).astype(jnp.float32)

    loss = dice_loss(x, t)
    jax.block_until_ready(loss)

    ref = dice_loss_ref(x, t)
    assert jnp.allclose(loss, ref, rtol=1e-5, atol=1e-6), (loss, ref)
    print("KERNEL_OK")
</pallas_src>

<mosaic_0001>
module attributes {stable_mosaic.version = 11 : i64} {
  func.func @_dice_kernel(%arg0: i32, %arg1: memref<32x128xf32, #tpu.memory_space<vmem>>, %arg2: memref<32x128xf32, #tpu.memory_space<vmem>>, %arg3: memref<8x128xf32, #tpu.memory_space<vmem>>, %arg4: memref<8x128xf32, #tpu.memory_space<vmem>>) attributes {dimension_semantics = [#tpu.dimension_semantics<arbitrary>], iteration_bounds = array<i64: 1>, scalar_prefetch = 0 : i64, scratch_operands = 1 : i64, tpu.core_type = #tpu.core_type<tc>, window_params = [{transform_indices = @transform_0, window_bounds = array<i64: 32, 128>}, {transform_indices = @transform_1, window_bounds = array<i64: 32, 128>}, {pipeline_mode = #tpu.pipeline_mode<synchronous>, transform_indices = @transform_2, window_bounds = array<i64: 8, 128>}]} {
    %c0_i32 = arith.constant 0 : i32
    %0 = arith.cmpi eq, %arg0, %c0_i32 : i32
    %1 = arith.extui %0 : i1 to i32
    %c0_i32_0 = arith.constant 0 : i32
    %2 = arith.cmpi ne, %1, %c0_i32_0 : i32
    scf.if %2 {
      %cst_10 = arith.constant 0.000000e+00 : f32
      %19 = vector.broadcast %cst_10 : f32 to vector<8x128xf32>
      %c0_11 = arith.constant 0 : index
      %c0_12 = arith.constant 0 : index
      %20 = vector.load %arg4[%c0_11, %c0_12] : memref<8x128xf32, #tpu.memory_space<vmem>>, vector<8x128xf32>
      tpu.vector_store %arg4[%c0_11, %c0_12], %19 {strides = array<i32>} : memref<8x128xf32, #tpu.memory_space<vmem>>, vector<8x128xf32>,
    } else {
    }
    %c0 = arith.constant 0 : index
    %c0_1 = arith.constant 0 : index
    %3 = vector.load %arg1[%c0, %c0_1] : memref<32x128xf32, #tpu.memory_space<vmem>>, vector<32x128xf32>
    %c0_2 = arith.constant 0 : index
    %c0_3 = arith.constant 0 : index
    %4 = vector.load %arg2[%c0_2, %c0_3] : memref<32x128xf32, #tpu.memory_space<vmem>>, vector<32x128xf32>
    %5 = arith.negf %3 : vector<32x128xf32>
    %6 = math.exp %5 : vector<32x128xf32>
    %cst = arith.constant 1.000000e+00 : f32
    %7 = vector.broadcast %cst : f32 to vector<32x128xf32>
    %8 = arith.addf %7, %6 : vector<32x128xf32>
    %9 = arith.divf %7, %8 : vector<32x128xf32>
    %c0_i32_4 = arith.constant 0 : i32
    %10 = arith.cmpi ne, %arg0, %c0_i32_4 : i32
    %11 = arith.extui %10 : i1 to i32
    %c0_i32_5 = arith.constant 0 : i32
    %12 = arith.cmpi ne, %11, %c0_i32_5 : i32
    scf.if %12 {
      %c0_10 = arith.constant 0 : index
      %c0_11 = arith.constant 0 : index
      %19 = vector.load %arg4[%c0_10, %c0_11] : memref<8x128xf32, #tpu.memory_space<vmem>>, vector<1x128xf32>
      %20 = arith.mulf %9, %4 : vector<32x128xf32>
      %cst_12 = arith.constant dense<0.000000e+00> : vector<128xf32>
      %21 = vector.multi_reduction <add>, %20, %cst_12 [0] : vector<32x128xf32> to vector<128xf32>
      %22 = vector.shape_cast %21 : vector<128xf32> to vector<1x128xf32>
      %23 = arith.addf %19, %22 : vector<1x128xf32>
      %c0_13 = arith.constant 0 : index
      %c0_14 = arith.constant 0 : index
      %24 = vector.load %arg4[%c0_13, %c0_14] : memref<8x128xf32, #tpu.memory_space<vmem>>, vector<1x128xf32>
      tpu.vector_store %arg4[%c0_13, %c0_14], %23 {strides = array<i32>} : memref<8x128xf32, #tpu.memory_space<vmem>>, vector<1x128xf32>,
      %c1 = arith.constant 1 : index
      %c0_15 = arith.constant 0 : index
      %25 = vector.load %arg4[%c1, %c0_15] : memref<8x128xf32, #tpu.memory_space<vmem>>, vector<1x128xf32>
      %26 = arith.addf %9, %4 : vector<32x128xf32>
      %cst_16 = arith.constant dense<0.000000e+00> : vector<128xf32>
      %27 = vector.multi_reduction <add>, %26, %cst_16 [0] : vector<32x128xf32> to vector<128xf32>
      %28 = vector.shape_cast %27 : vector<128xf32> to vector<1x128xf32>
      %29 = arith.addf %25, %28 : vector<1x128xf32>
      %c1_17 = arith.constant 1 : index
      %c0_18 = arith.constant 0 : index
      %30 = vector.load %arg4[%c1_17, %c0_18] : memref<8x128xf32, #tpu.memory_space<vmem>>, vector<1x128xf32>
      tpu.vector_store %arg4[%c1_17, %c0_18], %29 {strides = array<i32>} : memref<8x128xf32, #tpu.memory_space<vmem>>, vector<1x128xf32>,
    } else {
    }
    %c0_i32_6 = arith.constant 0 : i32
    %13 = arith.cmpi eq, %arg0, %c0_i32_6 : i32
    %14 = arith.extui %13 : i1 to i32
    %c0_i32_7 = arith.constant 0 : i32
    %15 = arith.cmpi ne, %14, %c0_i32_7 : i32
    scf.if %15 {
      %19 = tpu.iota {dimensions = array<i32: 0>} : vector<32x128xi32>
      %c128_i32 = arith.constant 128 : i32
      %20 = vector.broadcast %c128_i32 : i32 to vector<32x128xi32>
      %21 = arith.muli %19, %20 : vector<32x128xi32>
      %22 = tpu.iota {dimensions = array<i32: 1>} : vector<32x128xi32>
      %23 = arith.addi %21, %22 : vector<32x128xi32>
      %c2048_i32 = arith.constant 2048 : i32
      %24 = vector.broadcast %c2048_i32 : i32 to vector<32x128xi32>
      %25 = arith.cmpi slt, %23, %24 : vector<32x128xi32>
      %cst_10 = arith.constant 0.000000e+00 : f32
      %26 = vector.broadcast %cst_10 : f32 to vector<32x128xf32>
      %27 = arith.select %25, %9, %26 : vector<32x128xi1>, vector<32x128xf32>
      %cst_11 = arith.constant 0.000000e+00 : f32
      %28 = vector.broadcast %cst_11 : f32 to vector<32x128xf32>
      %29 = arith.select %25, %4, %28 : vector<32x128xi1>, vector<32x128xf32>
      %c0_12 = arith.constant 0 : index
      %c0_13 = arith.constant 0 : index
      %30 = vector.load %arg4[%c0_12, %c0_13] : memref<8x128xf32, #tpu.memory_space<vmem>>, vector<1x128xf32>
      %31 = arith.mulf %27, %29 : vector<32x128xf32>
      %cst_14 = arith.constant dense<0.000000e+00> : vector<128xf32>
      %32 = vector.multi_reduction <add>, %31, %cst_14 [0] : vector<32x128xf32> to vector<128xf32>
      %33 = vector.shape_cast %32 : vector<128xf32> to vector<1x128xf32>
      %34 = arith.addf %30, %33 : vector<1x128xf32>
      %c0_15 = arith.constant 0 : index
      %c0_16 = arith.constant 0 : index
      %35 = vector.load %arg4[%c0_15, %c0_16] : memref<8x128xf32, #tpu.memory_space<vmem>>, vector<1x128xf32>
      tpu.vector_store %arg4[%c0_15, %c0_16], %34 {strides = array<i32>} : memref<8x128xf32, #tpu.memory_space<vmem>>, vector<1x128xf32>,
      %c1 = arith.constant 1 : index
      %c0_17 = arith.constant 0 : index
      %36 = vector.load %arg4[%c1, %c0_17] : memref<8x128xf32, #tpu.memory_space<vmem>>, vector<1x128xf32>
      %37 = arith.addf %27, %29 : vector<32x128xf32>
      %cst_18 = arith.constant dense<0.000000e+00> : vector<128xf32>
      %38 = vector.multi_reduction <add>, %37, %cst_18 [0] : vector<32x128xf32> to vector<128xf32>
      %39 = vector.shape_cast %38 : vector<128xf32> to vector<1x128xf32>
      %40 = arith.addf %36, %39 : vector<1x128xf32>
      %c1_19 = arith.constant 1 : index
      %c0_20 = arith.constant 0 : index
      %41 = vector.load %arg4[%c1_19, %c0_20] : memref<8x128xf32, #tpu.memory_space<vmem>>, vector<1x128xf32>
      tpu.vector_store %arg4[%c1_19, %c0_20], %40 {strides = array<i32>} : memref<8x128xf32, #tpu.memory_space<vmem>>, vector<1x128xf32>,
    } else {
    }
    %c0_i32_8 = arith.constant 0 : i32
    %16 = arith.cmpi eq, %arg0, %c0_i32_8 : i32
    %17 = arith.extui %16 : i1 to i32
    %c0_i32_9 = arith.constant 0 : i32
    %18 = arith.cmpi ne, %17, %c0_i32_9 : i32
    scf.if %18 {
      %c0_10 = arith.constant 0 : index
      %c0_11 = arith.constant 0 : index
      %19 = vector.load %arg4[%c0_10, %c0_11] : memref<8x128xf32, #tpu.memory_space<vmem>>, vector<8x128xf32>
      %c0_12 = arith.constant 0 : index
      %c0_13 = arith.constant 0 : index
      %20 = vector.load %arg3[%c0_12, %c0_13] : memref<8x128xf32, #tpu.memory_space<vmem>>, vector<8x128xf32>
      tpu.vector_store %arg3[%c0_12, %c0_13], %19 {strides = array<i32>} : memref<8x128xf32, #tpu.memory_space<vmem>>, vector<8x128xf32>,
    } else {
    }
    return
  }
  func.func @transform_0(%arg0: i32) -> (i32, i32) {
    %c0_i32 = arith.constant 0 : i32
    %c0_i32_0 = arith.constant 0 : i32
    return %arg0, %c0_i32 : i32, i32
  }
  func.func @transform_1(%arg0: i32) -> (i32, i32) {
    %c0_i32 = arith.constant 0 : i32
    %c0_i32_0 = arith.constant 0 : i32
    return %arg0, %c0_i32 : i32, i32
  }
  func.func @transform_2(%arg0: i32) -> (i32, i32) {
    %c0_i32 = arith.constant 0 : i32
    %c0_i32_0 = arith.constant 0 : i32
    %c0_i32_1 = arith.constant 0 : i32
    return %c0_i32, %c0_i32_0 : i32, i32
  }
}

</mosaic_0001>

<llo_original>
// kernel: tpu_custom_call.1
$region0: #{tpu_custom_call.1}
  #allocation0 [shape = 'u32[]', space=smem, size = 0x4, offset = 0x4, fixed_abs, tag = 'smem constant byte address 0x4 - core index']
  #allocation1 [shape = 'u32[144,128]{1,0:T(1,128)}', space=vmem, size = 0x12000, scoped, tag = 'internal scratch']
  #allocation2 [shape = 'f32[8,128]{1,0:T(8,128)}', space=vmem, size = 0x1000, scoped, tag = 'scratch operand']
  %s0 = inlined_call_operand.hbm [shape: f32[16,128], index: 0, kind: input, shape index: {}]
  %s1 = inlined_call_operand.hbm [shape: f32[16,128], index: 1, kind: input, shape index: {}]
  %s2 = inlined_call_operand.hbm [shape: f32[8,128], index: 2, kind: output, shape index: {}]
  %s3 = sld [smem:[#allocation0]]
  $region38: #{tpu_custom_call.1} parent=0
    _
  %s5 = ssub.s32 1, %s3
  %s6 = scalar_select 0, %s5, %s3
  $region1: #{tpu_custom_call.1} parent=0
    #allocation3 [shape = 'u8[16384]{0}', space=vmem, size = 0x4000, scoped, tag = 'input window, operand 0, single buffered']
    #allocation4 [shape = 's32[1]{0}', space=sflag, size = 0x4, scoped, tag = 'scoped memory for tpu_custom_call.1']
    #allocation5 [shape = 's32[1]{0}', space=sflag, size = 0x4, scoped, tag = 'scoped memory for tpu_custom_call.1']
    #allocation6 [shape = 'u8[16384]{0}', space=vmem, size = 0x4000, scoped, tag = 'input window, operand 1, single buffered']
    #allocation7 [shape = 's32[1]{0}', space=sflag, size = 0x4, scoped, tag = 'scoped memory for tpu_custom_call.1']
    #allocation8 [shape = 'u8[4096]{0}', space=vmem, size = 0x1000, scoped, tag = 'output window, operand 0, single buffered']
    %7 = vsyncpa [#allocation4], 0
    %8 = vsyncpa [#allocation7], 0
    %9 = vsyncpa [#allocation5], 0
    // Predicated region
    $region2: #{tpu_custom_call.1} parent=1 // pred_check
      _
    $region3: #{tpu_custom_call.1} parent=1 // pred_check_branch
      %11 = sbr.rel (0) target = $region5
    $region4: #{tpu_custom_call.1} parent=1 // pred_region
      %s13 = ssub.s32 512, 256
      %14 = vsyncadd [#allocation4], %s13
      %s15 = sshll.u32 [#allocation3], 4
      %s16 = int_to_ptr.vmem [resolvable:$true] %s15
      %21 = dma.hbm_to_vmem [thread:$0]  %s0, 256, %s16, [#allocation4], 128, 128, 8
    $region5: #{tpu_custom_call.1} parent=1 // pred_fallthru
      _
    // Predicated region
    $region6: #{tpu_custom_call.1} parent=1 // pred_check
      _
    $region7: #{tpu_custom_call.1} parent=1 // pred_check_branch
      %23 = sbr.rel (0) target = $region9
    $region8: #{tpu_custom_call.1} parent=1 // pred_region
      %s25 = ssub.s32 512, 256
      %26 = vsyncadd [#allocation7], %s25
      %s27 = sshll.u32 [#allocation6], 4
      %s28 = int_to_ptr.vmem [resolvable:$true] %s27
      %33 = dma.hbm_to_vmem [thread:$0]  %s1, 256, %s28, [#allocation7], 128, 128, 8
    $region9: #{tpu_custom_call.1} parent=1 // pred_fallthru
      _
    // Predicated region
    $region10: #{tpu_custom_call.1} parent=1 // pred_check
      _
    $region11: #{tpu_custom_call.1} parent=1 // pred_check_branch
      %35 = sbr.rel (0) target = $region13
    $region12: #{tpu_custom_call.1} parent=1 // pred_region
      %36 = dma.done [#allocation4], 512
    $region13: #{tpu_custom_call.1} parent=1 // pred_fallthru
      _
    // Predicated region
    $region14: #{tpu_custom_call.1} parent=1 // pred_check
      _
    $region15: #{tpu_custom_call.1} parent=1 // pred_check_branch
      %38 = sbr.rel (0) target = $region17
    $region16: #{tpu_custom_call.1} parent=1 // pred_region
      %39 = dma.done [#allocation7], 512
    $region17: #{tpu_custom_call.1} parent=1 // pred_fallthru
      _
    %p40 = scmp.eq.s32.totalorder 0, 0
    // Predicated region
    $region18: #{tpu_custom_call.1} parent=1 // pred_check
      %p41 = pneg %p40
    $region19: #{tpu_custom_call.1} parent=1 // pred_check_branch
      %43 = sbr.rel (%p41) target = $region21
    $region20: #{tpu_custom_call.1} parent=1 // pred_region
      %44 = vst [vmem:[#allocation2] sm:$0xff] 0.0
    $region21: #{tpu_custom_call.1} parent=1 // pred_fallthru
      _
    %v45 = vld [vmem:[#allocation3] sm:$0xff]
    %v46 = vld [vmem:[#allocation3 + $0x8] sm:$0xff]
    %v47 = vld [vmem:[#allocation3 + $0x10] sm:$0xff]
    %v48 = vld [vmem:[#allocation3 + $0x18] sm:$0xff]
    %v49 = vld [vmem:[#allocation6] sm:$0xff]
    %v50 = vld [vmem:[#allocation6 + $0x8] sm:$0xff]
    %v51 = vld [vmem:[#allocation6 + $0x10] sm:$0xff]
    %v52 = vld [vmem:[#allocation6 + $0x18] sm:$0xff]
    %v53 = vxor.u32 %v45, 2147483648
    %v54 = vxor.u32 %v46, 2147483648
    %v55 = vxor.u32 %v47, 2147483648
    %v56 = vxor.u32 %v48, 2147483648
    %v57 = vmul.f32 %v53, 1.442695
    %v58 = vpow.pop %v57
    %v59 = vmul.f32 %v54, 1.442695
    %v60 = vpow.pop %v59
    %v61 = vmul.f32 %v55, 1.442695
    %v62 = vpow.pop %v61
    %v63 = vmul.f32 %v56, 1.442695
    %v64 = vpow.pop %v63
    %v65 = vadd.f32 %v58, 1.0
    %v66 = vadd.f32 %v60, 1.0
    %v67 = vadd.f32 %v62, 1.0
    %v68 = vadd.f32 %v64, 1.0
    %v69 = vrcp.pop %v65
    %v70 = vmul.f32 1.0, %v69
    %v71 = vrcp.pop %v66
    %v72 = vmul.f32 1.0, %v71
    %v73 = vrcp.pop %v67
    %v74 = vmul.f32 1.0, %v73
    %v75 = vrcp.pop %v68
    %v76 = vmul.f32 1.0, %v75
    %p77 = scmp.ne.s32.totalorder 0, 0
    // Predicated region
    $region22: #{tpu_custom_call.1} parent=1 // pred_check
      %p78 = pneg %p77
    $region23: #{tpu_custom_call.1} parent=1 // pred_check_branch
      %80 = sbr.rel (%p78) target = $region25
    $region24: #{tpu_custom_call.1} parent=1 // pred_region
      %v81 = vld [vmem:[#allocation2] sm:$0x1]
      %v82 = vmul.f32 %v70, %v49
      %v83 = vmul.f32 %v72, %v50
      %v84 = vmul.f32 %v74, %v51
      %v85 = vmul.f32 %v76, %v52
      %v86 = vadd.f32 %v82, %v83
      %v87 = vadd.f32 %v86, %v84
      %v88 = vadd.f32 %v87, %v85
      %v89 = vrot.slane %v88, 4
      %v90 = vadd.f32 %v88, %v89
      %v91 = vrot.slane %v90, 2
      %v92 = vadd.f32 %v90, %v91
      %v93 = vrot.slane %v92, 1
      %v94 = vadd.f32 %v92, %v93
      %v95 = vadd.f32 %v81, %v94
      %96 = vst [vmem:[#allocation2] sm:$0x1] %v95
      %v97 = vld [vmem:[#allocation2 + $0x1] sm:$0x1]
      %v98 = vadd.f32 %v70, %v49
      %v99 = vadd.f32 %v72, %v50
      %v100 = vadd.f32 %v74, %v51
      %v101 = vadd.f32 %v76, %v52
      %v102 = vadd.f32 %v98, %v99
      %v103 = vadd.f32 %v102, %v100
      %v104 = vadd.f32 %v103, %v101
      %v105 = vrot.slane %v104, 4
      %v106 = vadd.f32 %v104, %v105
      %v107 = vrot.slane %v106, 2
      %v108 = vadd.f32 %v106, %v107
      %v109 = vrot.slane %v108, 1
      %v110 = vadd.f32 %v108, %v109
      %v111 = vadd.f32 %v97, %v110
      %112 = vst [vmem:[#allocation2 + $0x1] sm:$0x1] %v111
    $region25: #{tpu_custom_call.1} parent=1 // pred_fallthru
      _
    // Predicated region
    $region26: #{tpu_custom_call.1} parent=1 // pred_check
      %p113 = pneg %p40
    $region27: #{tpu_custom_call.1} parent=1 // pred_check_branch
      %115 = sbr.rel (%p113) target = $region29
    $region28: #{tpu_custom_call.1} parent=1 // pred_region
      %v116 = vlaneseq
      %v117 = vshrl.u32 %v116, 7
      %v118 = vadd.s32 %v117, 8
      %v119 = vadd.s32 %v117, 16
      %v120 = vadd.s32 %v117, 24
      %v121 = vmul.u32 %v117, 128
      %v122 = vmul.u32 %v118, 128
      %v123 = vmul.u32 %v119, 128
      %v124 = vmul.u32 %v120, 128
      %v125 = vlaneseq
      %v126 = vand.u32 %v125, 127
      %v127 = vadd.s32 %v121, %v126
      %v128 = vadd.s32 %v122, %v126
      %v129 = vadd.s32 %v123, %v126
      %v130 = vadd.s32 %v124, %v126
      %vm131 = vcmp.lt.s32.totalorder %v127, 2048
      %vm132 = vcmp.lt.s32.totalorder %v128, 2048
      %vm133 = vcmp.lt.s32.totalorder %v129, 2048
      %vm134 = vcmp.lt.s32.totalorder %v130, 2048
      %v135 = vsel %vm131, %v70, 0.0
      %v136 = vsel %vm132, %v72, 0.0
      %v137 = vsel %vm133, %v74, 0.0
      %v138 = vsel %vm134, %v76, 0.0
      %v139 = vsel %vm131, %v49, 0.0
      %v140 = vsel %vm132, %v50, 0.0
      %v141 = vsel %vm133, %v51, 0.0
      %v142 = vsel %vm134, %v52, 0.0
      %v143 = vld [vmem:[#allocation2] sm:$0x1]
      %v144 = vmul.f32 %v135, %v139
      %v145 = vmul.f32 %v136, %v140
      %v146 = vmul.f32 %v137, %v141
      %v147 = vmul.f32 %v138, %v142
      %v148 = vadd.f32 %v144, %v145
      %v149 = vadd.f32 %v148, %v146
      %v150 = vadd.f32 %v149, %v147
      %v151 = vrot.slane %v150, 4
      %v152 = vadd.f32 %v150, %v151
      %v153 = vrot.slane %v152, 2
      %v154 = vadd.f32 %v152, %v153
      %v155 = vrot.slane %v154, 1
      %v156 = vadd.f32 %v154, %v155
      %v157 = vadd.f32 %v143, %v156
      %158 = vst [vmem:[#allocation2] sm:$0x1] %v157
      %v159 = vld [vmem:[#allocation2 + $0x1] sm:$0x1]
      %v160 = vadd.f32 %v135, %v139
      %v161 = vadd.f32 %v136, %v140
      %v162 = vadd.f32 %v137, %v141
      %v163 = vadd.f32 %v138, %v142
      %v164 = vadd.f32 %v160, %v161
      %v165 = vadd.f32 %v164, %v162
      %v166 = vadd.f32 %v165, %v163
      %v167 = vrot.slane %v166, 4
      %v168 = vadd.f32 %v166, %v167
      %v169 = vrot.slane %v168, 2
      %v170 = vadd.f32 %v168, %v169
      %v171 = vrot.slane %v170, 1
      %v172 = vadd.f32 %v170, %v171
      %v173 = vadd.f32 %v159, %v172
      %174 = vst [vmem:[#allocation2 + $0x1] sm:$0x1] %v173
      %v175 = vld [vmem:[#allocation2] sm:$0xff]
      %176 = vst [vmem:[#allocation8] sm:$0xff] %v175
    $region29: #{tpu_custom_call.1} parent=1 // pred_fallthru
      _
    // Predicated region
    $region30: #{tpu_custom_call.1} parent=1 // pred_check
      _
    $region31: #{tpu_custom_call.1} parent=1 // pred_check_branch
      %178 = sbr.rel (0) target = $region33
    $region32: #{tpu_custom_call.1} parent=1 // pred_region
      %s180 = ssub.s32 128, 128
      %181 = vsyncadd [#allocation5], %s180
      %s183 = sshll.u32 [#allocation8], 4
      %s184 = int_to_ptr.vmem [resolvable:$true] %s183
      %186 = dma.vmem_to_hbm [thread:$0]  %s184, 128, %s2, [#allocation5]
    $region33: #{tpu_custom_call.1} parent=1 // pred_fallthru
      _
    // Predicated region
    $region34: #{tpu_custom_call.1} parent=1 // pred_check
      _
    $region35: #{tpu_custom_call.1} parent=1 // pred_check_branch
      %188 = sbr.rel (0) target = $region37
    $region36: #{tpu_custom_call.1} parent=1 // pred_region
      %189 = dma.done [#allocation5], 128
    $region37: #{tpu_custom_call.1} parent=1 // pred_fallthru
      _
    %190 = vsyncpa [#allocation4], 1
    %191 = vsyncpa [#allocation7], 1
    %192 = vsyncpa [#allocation5], 1

</llo_original>
